<compile_context>
chip_gen: v7x
topology: tpu7x:2x2x1
jax: 0.10.0
libtpu: 0.0.40
codegen_flags: <defaults>
</compile_context>

<pallas_src>
import functools

import jax
import jax.numpy as jnp
from jax.experimental import pallas as pl
from jax.experimental.pallas import tpu as pltpu


def _round_up(x, m):
    return ((x + m - 1) // m) * m


def _mlp_kernel(*refs, n_layers, apply_relu):
    # refs = (x_ref, w0, b0, w1, b1, ..., w_head, b_head, out_ref)
    x_ref = refs[0]
    out_ref = refs[-1]
    params = refs[1:-1]

    h = x_ref[...]  # bf16 activation tile (TB, D_in); no extra cast.

    for i in range(n_layers):
        w = params[2 * i][...]       # bf16 (in, out) — VMEM-resident across batch tiles
        b = params[2 * i + 1][...]   # f32  (1, out)  — broadcasts over the batch rows
        acc = jnp.dot(h, w, preferred_element_type=jnp.float32) + b
        if i < n_layers - 1:
            # Hidden layer: optional ReLU, then back to bf16 for the next MXU pass.
            if apply_relu:
                acc = jnp.maximum(acc, 0.0)
            h = acc.astype(jnp.bfloat16)
        else:
            # Head: no activation; lane-dense (TB, D_out_pad) store in f32.
            out_ref[...] = acc.astype(out_ref.dtype)


def qapprox_forward(x, weights, biases, *, linear=False, tile_b=512):
    """Fused MLP forward pass in a single Pallas kernel.

    x:       (B, D_in) float32
    weights: list of (in, out) float32 arrays (hidden layers ... head)
    biases:  list of (out,)   float32 arrays (hidden layers ... head)
    """
    B, D_in = x.shape
    D_out = weights[-1].shape[1]
    n_layers = len(weights)

    # ---- batch tiling ------------------------------------------------------
    TB = min(tile_b, _round_up(B, 8))
    TB = _round_up(TB, 8)
    B_pad = _round_up(B, TB)
    if B_pad != B:
        x = jnp.pad(x, ((0, B_pad - B), (0, 0)))
    n_tiles = B_pad // TB

    # ---- lane-dense head: pad output features to a multiple of 128 ---------
    D_out_pad = _round_up(D_out, 128)

    # ---- parameter packing: bf16 weights, f32 (1, out) biases --------------
    flat_params = []
    for li, (w, b) in enumerate(zip(weights, biases)):
        if li == n_layers - 1 and D_out_pad != D_out:
            w = jnp.pad(w, ((0, 0), (0, D_out_pad - D_out)))
            b = jnp.pad(b, ((0, D_out_pad - D_out),))
        flat_params.append(w.astype(jnp.bfloat16))
        flat_params.append(b.astype(jnp.float32).reshape(1, -1))

    x_bf16 = x.astype(jnp.bfloat16)

    kernel = functools.partial(
        _mlp_kernel,
        n_layers=n_layers,
        apply_relu=not linear,
    )

    # x/out are tiled over the batch grid; params keep block index (0, 0) so they stay
    # resident in VMEM for every batch tile.
    in_specs = [pl.BlockSpec((TB, D_in), lambda i: (i, 0))]
    for p in flat_params:
        in_specs.append(pl.BlockSpec(p.shape, lambda i: (0, 0)))

    out = pl.pallas_call(
        kernel,
        out_shape=jax.ShapeDtypeStruct((B_pad, D_out_pad), jnp.float32),
        grid_spec=pltpu.PrefetchScalarGridSpec(
            num_scalar_prefetch=0,
            grid=(n_tiles,),
            in_specs=in_specs,
            out_specs=pl.BlockSpec((TB, D_out_pad), lambda i: (i, 0)),
        ),
        compiler_params=pltpu.CompilerParams(
            # batch tiles are independent -> megacore sharding on v7x, neutral on v5e/v6e
            dimension_semantics=("parallel",),
            # explicit VMEM budget; safe on v5e/v6e (128 MiB) and within v7x's 64 MiB
            vmem_limit_bytes=32 * 1024 * 1024,
        ),
    )(x_bf16, *flat_params)

    return out[:B, :D_out]


def init_params(key, D_in, D_out, H, hidden_layers):
    """Deterministic synthetic parameters matching QAproximator's shapes."""
    dims = [(D_in, H)] + [(H, H)] * (hidden_layers - 1) + [(H, D_out)]
    weights, biases = [], []
    for (fan_in, fan_out) in dims:
        key, kw, kb = jax.random.split(key, 3)
        bound = 1.0 / (fan_in ** 0.5)
        # stored as (in, out): kernel computes h @ W + b (== x @ W_pt.T + b)
        weights.append(jax.random.uniform(kw, (fan_in, fan_out), jnp.float32,
                                          -bound, bound))
        biases.append(jax.random.uniform(kb, (fan_out,), jnp.float32,
                                         -bound, bound))
    return weights, biases


def reference_forward(x, weights, biases, *, linear=False):
    """Pure-JAX reference with the same bf16-input / f32-accumulation quantization."""
    h = x.astype(jnp.bfloat16)
    for w, b in zip(weights[:-1], biases[:-1]):
        h = jnp.dot(h, w.astype(jnp.bfloat16),
                    preferred_element_type=jnp.float32) + b
        if not linear:
            h = jnp.maximum(h, 0.0)
        h = h.astype(jnp.bfloat16)
    return (jnp.dot(h, weights[-1].astype(jnp.bfloat16),
                    preferred_element_type=jnp.float32) + biases[-1])


if __name__ == "__main__":
    # Small shapes consistent with the module:
    # QAproximator(D_in=16, D_out=4, H=32, hidden_layers=3)
    B, D_in, D_out, H, hidden_layers = 8, 16, 4, 32, 3

    key = jax.random.PRNGKey(0)
    key, kx = jax.random.split(key)
    x = jax.random.normal(kx, (B, D_in), dtype=jnp.float32)

    weights, biases = init_params(key, D_in, D_out, H, hidden_layers)

    out = qapprox_forward(x, weights, biases)
    out = jax.block_until_ready(out)

    ref = reference_forward(x, weights, biases)
    assert out.shape == (B, D_out)
    assert jnp.allclose(out, ref, atol=1e-3, rtol=1e-3), "mismatch vs reference"

    print("KERNEL_OK")
</pallas_src>

<mosaic_0001>
module attributes {stable_mosaic.version = 11 : i64} {
  func.func @_mlp_kernel(%arg0: i32, %arg1: memref<8x16xbf16, #tpu.memory_space<vmem>>, %arg2: memref<16x32xbf16, #tpu.memory_space<vmem>>, %arg3: memref<1x32xf32, #tpu.memory_space<vmem>>, %arg4: memref<32x32xbf16, #tpu.memory_space<vmem>>, %arg5: memref<1x32xf32, #tpu.memory_space<vmem>>, %arg6: memref<32x32xbf16, #tpu.memory_space<vmem>>, %arg7: memref<1x32xf32, #tpu.memory_space<vmem>>, %arg8: memref<32x128xbf16, #tpu.memory_space<vmem>>, %arg9: memref<1x128xf32, #tpu.memory_space<vmem>>, %arg10: memref<8x128xf32, #tpu.memory_space<vmem>>) attributes {dimension_semantics = [#tpu.dimension_semantics<parallel>], iteration_bounds = array<i64: 1>, scalar_prefetch = 0 : i64, scratch_operands = 0 : i64, tpu.core_type = #tpu.core_type<tc>, window_params = [{transform_indices = @transform_0, window_bounds = array<i64: 8, 16>}, {pipeline_mode = #tpu.pipeline_mode<synchronous>, transform_indices = @transform_1, window_bounds = array<i64: 16, 32>}, {pipeline_mode = #tpu.pipeline_mode<synchronous>, transform_indices = @transform_2, window_bounds = array<i64: 1, 32>}, {pipeline_mode = #tpu.pipeline_mode<synchronous>, transform_indices = @transform_3, window_bounds = array<i64: 32, 32>}, {pipeline_mode = #tpu.pipeline_mode<synchronous>, transform_indices = @transform_4, window_bounds = array<i64: 1, 32>}, {pipeline_mode = #tpu.pipeline_mode<synchronous>, transform_indices = @transform_5, window_bounds = array<i64: 32, 32>}, {pipeline_mode = #tpu.pipeline_mode<synchronous>, transform_indices = @transform_6, window_bounds = array<i64: 1, 32>}, {pipeline_mode = #tpu.pipeline_mode<synchronous>, transform_indices = @transform_7, window_bounds = array<i64: 32, 128>}, {pipeline_mode = #tpu.pipeline_mode<synchronous>, transform_indices = @transform_8, window_bounds = array<i64: 1, 128>}, {transform_indices = @transform_9, window_bounds = array<i64: 8, 128>}]} {
    %c0 = arith.constant 0 : index
    %c0_0 = arith.constant 0 : index
    %0 = vector.load %arg1[%c0, %c0_0] : memref<8x16xbf16, #tpu.memory_space<vmem>>, vector<8x16xbf16>
    %c0_1 = arith.constant 0 : index
    %c0_2 = arith.constant 0 : index
    %1 = vector.load %arg2[%c0_1, %c0_2] : memref<16x32xbf16, #tpu.memory_space<vmem>>, vector<16x32xbf16>
    %c0_3 = arith.constant 0 : index
    %c0_4 = arith.constant 0 : index
    %2 = vector.load %arg3[%c0_3, %c0_4] : memref<1x32xf32, #tpu.memory_space<vmem>>, vector<1x32xf32>
    %cst = arith.constant dense<0.000000e+00> : vector<8x32xf32>
    %3 = tpu.matmul %0, %1, %cst {dimension_numbers = #tpu.dot_dimension_numbers<[1], [0], [0], [1], [0, 0, 1, 1], [], []>} : vector<8x16xbf16>, vector<16x32xbf16>, vector<8x32xf32> -> vector<8x32xf32>
    %4 = vector.broadcast %2 : vector<1x32xf32> to vector<8x32xf32>
    %5 = arith.addf %3, %4 : vector<8x32xf32>
    %cst_5 = arith.constant 0.000000e+00 : f32
    %6 = vector.broadcast %cst_5 : f32 to vector<8x32xf32>
    %7 = arith.maximumf %5, %6 : vector<8x32xf32>
    %8 = arith.truncf %7 : vector<8x32xf32> to vector<8x32xbf16>
    %c0_6 = arith.constant 0 : index
    %c0_7 = arith.constant 0 : index
    %9 = vector.load %arg4[%c0_6, %c0_7] : memref<32x32xbf16, #tpu.memory_space<vmem>>, vector<32x32xbf16>
    %c0_8 = arith.constant 0 : index
    %c0_9 = arith.constant 0 : index
    %10 = vector.load %arg5[%c0_8, %c0_9] : memref<1x32xf32, #tpu.memory_space<vmem>>, vector<1x32xf32>
    %cst_10 = arith.constant dense<0.000000e+00> : vector<8x32xf32>
    %11 = tpu.matmul %8, %9, %cst_10 {dimension_numbers = #tpu.dot_dimension_numbers<[1], [0], [0], [1], [0, 0, 1, 1], [], []>} : vector<8x32xbf16>, vector<32x32xbf16>, vector<8x32xf32> -> vector<8x32xf32>
    %12 = vector.broadcast %10 : vector<1x32xf32> to vector<8x32xf32>
    %13 = arith.addf %11, %12 : vector<8x32xf32>
    %cst_11 = arith.constant 0.000000e+00 : f32
    %14 = vector.broadcast %cst_11 : f32 to vector<8x32xf32>
    %15 = arith.maximumf %13, %14 : vector<8x32xf32>
    %16 = arith.truncf %15 : vector<8x32xf32> to vector<8x32xbf16>
    %c0_12 = arith.constant 0 : index
    %c0_13 = arith.constant 0 : index
    %17 = vector.load %arg6[%c0_12, %c0_13] : memref<32x32xbf16, #tpu.memory_space<vmem>>, vector<32x32xbf16>
    %c0_14 = arith.constant 0 : index
    %c0_15 = arith.constant 0 : index
    %18 = vector.load %arg7[%c0_14, %c0_15] : memref<1x32xf32, #tpu.memory_space<vmem>>, vector<1x32xf32>
    %cst_16 = arith.constant dense<0.000000e+00> : vector<8x32xf32>
    %19 = tpu.matmul %16, %17, %cst_16 {dimension_numbers = #tpu.dot_dimension_numbers<[1], [0], [0], [1], [0, 0, 1, 1], [], []>} : vector<8x32xbf16>, vector<32x32xbf16>, vector<8x32xf32> -> vector<8x32xf32>
    %20 = vector.broadcast %18 : vector<1x32xf32> to vector<8x32xf32>
    %21 = arith.addf %19, %20 : vector<8x32xf32>
    %cst_17 = arith.constant 0.000000e+00 : f32
    %22 = vector.broadcast %cst_17 : f32 to vector<8x32xf32>
    %23 = arith.maximumf %21, %22 : vector<8x32xf32>
    %24 = arith.truncf %23 : vector<8x32xf32> to vector<8x32xbf16>
    %c0_18 = arith.constant 0 : index
    %c0_19 = arith.constant 0 : index
    %25 = vector.load %arg8[%c0_18, %c0_19] : memref<32x128xbf16, #tpu.memory_space<vmem>>, vector<32x128xbf16>
    %c0_20 = arith.constant 0 : index
    %c0_21 = arith.constant 0 : index
    %26 = vector.load %arg9[%c0_20, %c0_21] : memref<1x128xf32, #tpu.memory_space<vmem>>, vector<1x128xf32>
    %cst_22 = arith.constant dense<0.000000e+00> : vector<8x128xf32>
    %27 = tpu.matmul %24, %25, %cst_22 {dimension_numbers = #tpu.dot_dimension_numbers<[1], [0], [0], [1], [0, 0, 1, 1], [], []>} : vector<8x32xbf16>, vector<32x128xbf16>, vector<8x128xf32> -> vector<8x128xf32>
    %28 = vector.broadcast %26 : vector<1x128xf32> to vector<8x128xf32>
    %29 = arith.addf %27, %28 : vector<8x128xf32>
    %c0_23 = arith.constant 0 : index
    %c0_24 = arith.constant 0 : index
    %30 = vector.load %arg10[%c0_23, %c0_24] : memref<8x128xf32, #tpu.memory_space<vmem>>, vector<8x128xf32>
    tpu.vector_store %arg10[%c0_23, %c0_24], %29 {strides = array<i32>} : memref<8x128xf32, #tpu.memory_space<vmem>>, vector<8x128xf32>,
    return
  }
  func.func @transform_0(%arg0: i32) -> (i32, i32) {
    %c0_i32 = arith.constant 0 : i32
    %c0_i32_0 = arith.constant 0 : i32
    return %arg0, %c0_i32 : i32, i32
  }
  func.func @transform_1(%arg0: i32) -> (i32, i32) {
    %c0_i32 = arith.constant 0 : i32
    %c0_i32_0 = arith.constant 0 : i32
    %c0_i32_1 = arith.constant 0 : i32
    return %c0_i32, %c0_i32_0 : i32, i32
  }
  func.func @transform_2(%arg0: i32) -> (i32, i32) {
    %c0_i32 = arith.constant 0 : i32
    %c0_i32_0 = arith.constant 0 : i32
    %c0_i32_1 = arith.constant 0 : i32
    return %c0_i32, %c0_i32_0 : i32, i32
  }
  func.func @transform_3(%arg0: i32) -> (i32, i32) {
    %c0_i32 = arith.constant 0 : i32
    %c0_i32_0 = arith.constant 0 : i32
    %c0_i32_1 = arith.constant 0 : i32
    return %c0_i32, %c0_i32_0 : i32, i32
  }
  func.func @transform_4(%arg0: i32) -> (i32, i32) {
    %c0_i32 = arith.constant 0 : i32
    %c0_i32_0 = arith.constant 0 : i32
    %c0_i32_1 = arith.constant 0 : i32
    return %c0_i32, %c0_i32_0 : i32, i32
  }
  func.func @transform_5(%arg0: i32) -> (i32, i32) {
    %c0_i32 = arith.constant 0 : i32
    %c0_i32_0 = arith.constant 0 : i32
    %c0_i32_1 = arith.constant 0 : i32
    return %c0_i32, %c0_i32_0 : i32, i32
  }
  func.func @transform_6(%arg0: i32) -> (i32, i32) {
    %c0_i32 = arith.constant 0 : i32
    %c0_i32_0 = arith.constant 0 : i32
    %c0_i32_1 = arith.constant 0 : i32
    return %c0_i32, %c0_i32_0 : i32, i32
  }
  func.func @transform_7(%arg0: i32) -> (i32, i32) {
    %c0_i32 = arith.constant 0 : i32
    %c0_i32_0 = arith.constant 0 : i32
    %c0_i32_1 = arith.constant 0 : i32
    return %c0_i32, %c0_i32_0 : i32, i32
  }
  func.func @transform_8(%arg0: i32) -> (i32, i32) {
    %c0_i32 = arith.constant 0 : i32
    %c0_i32_0 = arith.constant 0 : i32
    %c0_i32_1 = arith.constant 0 : i32
    return %c0_i32, %c0_i32_0 : i32, i32
  }
  func.func @transform_9(%arg0: i32) -> (i32, i32) {
    %c0_i32 = arith.constant 0 : i32
    %c0_i32_0 = arith.constant 0 : i32
    return %arg0, %c0_i32 : i32, i32
  }
}

</mosaic_0001>

<llo_original>
// kernel: tpu_custom_call.1
$region0: #{tpu_custom_call.1}
  #allocation0 [shape = 'u32[]', space=smem, size = 0x4, offset = 0x4, fixed_abs, tag = 'smem constant byte address 0x4 - core index']
  #allocation1 [shape = 'u32[144,128]{1,0:T(1,128)}', space=vmem, size = 0x12000, scoped, tag = 'internal scratch']
  %s0 = inlined_call_operand.hbm [shape: bf16[8,16], index: 0, kind: input, shape index: {}]
  %s1 = inlined_call_operand.hbm [shape: bf16[16,32], index: 1, kind: input, shape index: {}]
  %s2 = inlined_call_operand.vmem [shape: f32[1,32], index: 2, kind: input, shape index: {}]
  %s3 = inlined_call_operand.hbm [shape: bf16[32,32], index: 3, kind: input, shape index: {}]
  %s4 = inlined_call_operand.vmem [shape: f32[1,32], index: 4, kind: input, shape index: {}]
  %s5 = inlined_call_operand.vmem [shape: bf16[32,32], index: 5, kind: input, shape index: {}]
  %s6 = inlined_call_operand.vmem [shape: f32[1,32], index: 6, kind: input, shape index: {}]
  %s7 = inlined_call_operand.hbm [shape: bf16[32,128], index: 7, kind: input, shape index: {}]
  %s8 = inlined_call_operand.vmem [shape: f32[1,128], index: 8, kind: input, shape index: {}]
  %s9 = inlined_call_operand.hbm [shape: f32[8,128], index: 9, kind: output, shape index: {}]
  %s10 = sld [smem:[#allocation0]]
  $region62: #{tpu_custom_call.1} parent=0
    _
  %s12 = ssub.s32 1, %s10
  %s13 = scalar_select 0, %s12, %s10
  $region1: #{tpu_custom_call.1} parent=0
    #allocation2 [shape = 'u8[2048]{0}', space=vmem, size = 0x800, scoped, tag = 'input window, operand 0, single buffered']
    #allocation3 [shape = 's32[1]{0}', space=sflag, size = 0x4, scoped, tag = 'scoped memory for tpu_custom_call.1']
    #allocation4 [shape = 's32[1]{0}', space=sflag, size = 0x4, scoped, tag = 'scoped memory for tpu_custom_call.1']
    #allocation5 [shape = 'u8[4096]{0}', space=vmem, size = 0x1000, scoped, tag = 'input window, operand 1, single buffered']
    #allocation6 [shape = 's32[1]{0}', space=sflag, size = 0x4, scoped, tag = 'scoped memory for tpu_custom_call.1']
    #allocation7 [shape = 'u8[8192]{0}', space=vmem, size = 0x2000, scoped, tag = 'input window, operand 3, single buffered']
    #allocation8 [shape = 'u8[8192]{0}', space=vmem, size = 0x2000, scoped, tag = 'input window, operand 7, single buffered']
    #allocation9 [shape = 's32[1]{0}', space=sflag, size = 0x4, scoped, tag = 'scoped memory for tpu_custom_call.1']
    #allocation10 [shape = 'u8[4096]{0}', space=vmem, size = 0x1000, scoped, tag = 'output window, operand 0, single buffered']
    %14 = vsyncpa [#allocation3], 0
    %15 = vsyncpa [#allocation6], 0
    %16 = vsyncpa [#allocation9], 0
    %17 = vsyncpa [#allocation4], 0
    // Predicated region
    $region2: #{tpu_custom_call.1} parent=1 // pred_check
      _
    $region3: #{tpu_custom_call.1} parent=1 // pred_check_branch
      %19 = sbr.rel (0) target = $region5
    $region4: #{tpu_custom_call.1} parent=1 // pred_region
      %s21 = ssub.s32 64, 64
      %22 = vsyncadd [#allocation3], %s21
      %s24 = sshll.u32 [#allocation2], 4
      %s25 = int_to_ptr.vmem [resolvable:$true] %s24
      %27 = dma.hbm_to_vmem [thread:$0]  %s0, 64, %s25, [#allocation3]
    $region5: #{tpu_custom_call.1} parent=1 // pred_fallthru
      _
    // Predicated region
    $region6: #{tpu_custom_call.1} parent=1 // pred_check
      _
    $region7: #{tpu_custom_call.1} parent=1 // pred_check_branch
      %29 = sbr.rel (0) target = $region9
    $region8: #{tpu_custom_call.1} parent=1 // pred_region
      %s31 = ssub.s32 128, 128
      %32 = vsyncadd [#allocation6], %s31
      %s33 = sshll.u32 [#allocation5], 4
      %s34 = int_to_ptr.vmem [resolvable:$true] %s33
      %39 = dma.hbm_to_vmem [thread:$0]  %s1, 128, %s34, [#allocation6], 64, 64, 4
    $region9: #{tpu_custom_call.1} parent=1 // pred_fallthru
      _
    // Predicated region
    $region10: #{tpu_custom_call.1} parent=1 // pred_check
      _
    $region11: #{tpu_custom_call.1} parent=1 // pred_check_branch
      %41 = sbr.rel (0) target = $region13
    $region12: #{tpu_custom_call.1} parent=1 // pred_region
      _
    $region13: #{tpu_custom_call.1} parent=1 // pred_fallthru
      _
    // Predicated region
    $region14: #{tpu_custom_call.1} parent=1 // pred_check
      _
    $region15: #{tpu_custom_call.1} parent=1 // pred_check_branch
      %43 = sbr.rel (0) target = $region17
    $region16: #{tpu_custom_call.1} parent=1 // pred_region
      %s45 = ssub.s32 256, 256
      %46 = vsyncadd [#allocation6], %s45
      %s47 = sshll.u32 [#allocation7], 4
      %s48 = int_to_ptr.vmem [resolvable:$true] %s47
      %53 = dma.hbm_to_vmem [thread:$0]  %s3, 256, %s48, [#allocation6], 64, 64, 4
    $region17: #{tpu_custom_call.1} parent=1 // pred_fallthru
      _
    // Predicated region
    $region18: #{tpu_custom_call.1} parent=1 // pred_check
      _
    $region19: #{tpu_custom_call.1} parent=1 // pred_check_branch
      %55 = sbr.rel (0) target = $region21
    $region20: #{tpu_custom_call.1} parent=1 // pred_region
      _
    $region21: #{tpu_custom_call.1} parent=1 // pred_fallthru
      _
    // Predicated region
    $region22: #{tpu_custom_call.1} parent=1 // pred_check
      _
    $region23: #{tpu_custom_call.1} parent=1 // pred_check_branch
      %57 = sbr.rel (0) target = $region25
    $region24: #{tpu_custom_call.1} parent=1 // pred_region
      _
    $region25: #{tpu_custom_call.1} parent=1 // pred_fallthru
      _
    // Predicated region
    $region26: #{tpu_custom_call.1} parent=1 // pred_check
      _
    $region27: #{tpu_custom_call.1} parent=1 // pred_check_branch
      %59 = sbr.rel (0) target = $region29
    $region28: #{tpu_custom_call.1} parent=1 // pred_region
      _
    $region29: #{tpu_custom_call.1} parent=1 // pred_fallthru
      _
    // Predicated region
    $region30: #{tpu_custom_call.1} parent=1 // pred_check
      _
    $region31: #{tpu_custom_call.1} parent=1 // pred_check_branch
      %61 = sbr.rel (0) target = $region33
    $region32: #{tpu_custom_call.1} parent=1 // pred_region
      %s63 = ssub.s32 256, 256
      %64 = vsyncadd [#allocation9], %s63
      %s65 = sshll.u32 [#allocation8], 4
      %s66 = int_to_ptr.vmem [resolvable:$true] %s65
      %71 = dma.hbm_to_vmem [thread:$0]  %s7, 256, %s66, [#allocation9], 64, 64, 4
    $region33: #{tpu_custom_call.1} parent=1 // pred_fallthru
      _
    // Predicated region
    $region34: #{tpu_custom_call.1} parent=1 // pred_check
      _
    $region35: #{tpu_custom_call.1} parent=1 // pred_check_branch
      %73 = sbr.rel (0) target = $region37
    $region36: #{tpu_custom_call.1} parent=1 // pred_region
      _
    $region37: #{tpu_custom_call.1} parent=1 // pred_fallthru
      _
    // Predicated region
    $region38: #{tpu_custom_call.1} parent=1 // pred_check
      _
    $region39: #{tpu_custom_call.1} parent=1 // pred_check_branch
      %75 = sbr.rel (0) target = $region41
    $region40: #{tpu_custom_call.1} parent=1 // pred_region
      %76 = dma.done [#allocation3], 64
    $region41: #{tpu_custom_call.1} parent=1 // pred_fallthru
      _
    // Predicated region
    $region42: #{tpu_custom_call.1} parent=1 // pred_check
      _
    $region43: #{tpu_custom_call.1} parent=1 // pred_check_branch
      %78 = sbr.rel (0) target = $region45
    $region44: #{tpu_custom_call.1} parent=1 // pred_region
      %79 = dma.done [#allocation6], 128
    $region45: #{tpu_custom_call.1} parent=1 // pred_fallthru
      _
    // Predicated region
    $region46: #{tpu_custom_call.1} parent=1 // pred_check
      _
    $region47: #{tpu_custom_call.1} parent=1 // pred_check_branch
      %81 = sbr.rel (0) target = $region49
    $region48: #{tpu_custom_call.1} parent=1 // pred_region
      %82 = dma.done [#allocation6], 256
    $region49: #{tpu_custom_call.1} parent=1 // pred_fallthru
      _
    // Predicated region
    $region50: #{tpu_custom_call.1} parent=1 // pred_check
      _
    $region51: #{tpu_custom_call.1} parent=1 // pred_check_branch
      %84 = sbr.rel (0) target = $region53
    $region52: #{tpu_custom_call.1} parent=1 // pred_region
      %85 = dma.done [#allocation9], 256
    $region53: #{tpu_custom_call.1} parent=1 // pred_fallthru
      _
    %v87 = vld [vmem:[#allocation2] sm:$0xf]
    %v88 = vld [vmem:[#allocation5] sm:$0xf]
    %v89 = vld [vmem:[#allocation5 + $0x4] sm:$0xf]
    %v90 = vld [vmem:[%s2] sm:$0x1]
    %v92 = vlaneseq
    %v93 = vshrl.u32 %v92, 7
    %v94 = vsub.s32 0, %v93
    %v95 = vrot.slane %v90, %v94
    %v99 = vunpack.c.l.b16 %v88
    %v100 = vunpack.c.l.b16 %v89
    %v101 = vpack.c.b16 %v100, %v99
    %vm103 = vcmask 130048
    %v105 = vsel %vm103, %v87, 0
    %107 = vmatprep.subr.bf16.mxu0 0
    %108 = vmatpush1.bf16.msra.mxu0 %v101
    %109 = vmatprep.subr.bf16.mxu0 0
    %110 = vmatpush1.bf16.msra.mxu0 0
    %111 = vmatprep.subr.bf16.mxu0 0
    %112 = vmatpush1.bf16.msra.mxu0 0
    %113 = vmatprep.subr.bf16.mxu0 0
    %114 = vmatpush1.bf16.msra.mxu0 0
    %115 = vmatprep.subr.bf16.mxu0 0
    %116 = vmatpush1.bf16.msra.mxu0 0
    %117 = vmatprep.subr.bf16.mxu0 0
    %118 = vmatpush1.bf16.msra.mxu0 0
    %119 = vmatprep.subr.bf16.mxu0 0
    %120 = vmatpush1.bf16.msra.mxu0 0
    %121 = vmatprep.subr.bf16.mxu0 0
    %122 = vmatpush1.bf16.msra.mxu0 0
    %123 = vmatprep.subr.bf16.mxu0 0
    %124 = vmatpush1.bf16.msra.mxu0 0
    %125 = vmatprep.subr.bf16.mxu0 0
    %126 = vmatpush1.bf16.msra.mxu0 0
    %127 = vmatprep.subr.bf16.mxu0 0
    %128 = vmatpush1.bf16.msra.mxu0 0
    %129 = vmatprep.subr.bf16.mxu0 0
    %130 = vmatpush1.bf16.msra.mxu0 0
    %131 = vmatprep.subr.bf16.mxu0 0
    %132 = vmatpush1.bf16.msra.mxu0 0
    %133 = vmatprep.subr.bf16.mxu0 0
    %134 = vmatpush1.bf16.msra.mxu0 0
    %135 = vmatprep.subr.bf16.mxu0 0
    %136 = vmatpush1.bf16.msra.mxu0 0
    %137 = vmatprep.subr.bf16.mxu0 0
    %138 = vmatpush1.bf16.msra.mxu0 0
    %139 = vmatprep.mubr.bf16.mxu0 0
    %140 = vmatmul.mubr.bf16.gmra.mrb[0].mxu0 %v105
    %v141 = vpop.f32.mrb[0].mxu0
    %v142 = vadd.f32 %v95, %v141
    %v143 = vpop.f32.mrb[0].mxu0
    %v144 = vpop.f32.mrb[0].mxu0
    %v145 = vpop.f32.mrb[0].mxu0
    %146 = vdwg.mxu0
    %v147 = vmax.f32 %v142, 0.0
    %v148 = vpack.c.bf16 %v147, %v147
    %v149 = vld [vmem:[#allocation7] sm:$0xf]
    %v150 = vld [vmem:[#allocation7 + $0x4] sm:$0xf]
    %v151 = vld [vmem:[#allocation7 + $0x8] sm:$0xf]
    %v152 = vld [vmem:[#allocation7 + $0xc] sm:$0xf]
    %v153 = vld [vmem:[%s4] sm:$0x1]
    %v155 = vlaneseq
    %v156 = vshrl.u32 %v155, 7
    %v157 = vsub.s32 0, %v156
    %v158 = vrot.slane %v153, %v157
    %v164 = vunpack.c.l.b16 %v149
    %v165 = vunpack.c.l.b16 %v150
    %v166 = vunpack.c.l.b16 %v151
    %v167 = vunpack.c.l.b16 %v152
    %v168 = vpack.c.b16 %v165, %v164
    %v169 = vpack.c.b16 %v167, %v166
    %vm172 = vcmask 261120
    %v174 = vsel %vm172, %v148, 0
    %176 = vmatprep.subr.bf16.mxu0 0
    %177 = vmatpush1.bf16.msra.mxu0 %v168
    %178 = vmatprep.subr.bf16.mxu0 0
    %179 = vmatpush1.bf16.msra.mxu0 %v169
    %180 = vmatprep.subr.bf16.mxu0 0
    %181 = vmatpush1.bf16.msra.mxu0 0
    %182 = vmatprep.subr.bf16.mxu0 0
    %183 = vmatpush1.bf16.msra.mxu0 0
    %184 = vmatprep.subr.bf16.mxu0 0
    %185 = vmatpush1.bf16.msra.mxu0 0
    %186 = vmatprep.subr.bf16.mxu0 0
    %187 = vmatpush1.bf16.msra.mxu0 0
    %188 = vmatprep.subr.bf16.mxu0 0
    %189 = vmatpush1.bf16.msra.mxu0 0
    %190 = vmatprep.subr.bf16.mxu0 0
    %191 = vmatpush1.bf16.msra.mxu0 0
    %192 = vmatprep.subr.bf16.mxu0 0
    %193 = vmatpush1.bf16.msra.mxu0 0
    %194 = vmatprep.subr.bf16.mxu0 0
    %195 = vmatpush1.bf16.msra.mxu0 0
    %196 = vmatprep.subr.bf16.mxu0 0
    %197 = vmatpush1.bf16.msra.mxu0 0
    %198 = vmatprep.subr.bf16.mxu0 0
    %199 = vmatpush1.bf16.msra.mxu0 0
    %200 = vmatprep.subr.bf16.mxu0 0
    %201 = vmatpush1.bf16.msra.mxu0 0
    %202 = vmatprep.subr.bf16.mxu0 0
    %203 = vmatpush1.bf16.msra.mxu0 0
    %204 = vmatprep.subr.bf16.mxu0 0
    %205 = vmatpush1.bf16.msra.mxu0 0
    %206 = vmatprep.subr.bf16.mxu0 0
    %207 = vmatpush1.bf16.msra.mxu0 0
    %208 = vmatprep.mubr.bf16.mxu0 0
    %209 = vmatmul.mubr.bf16.gmra.mrb[0].mxu0 %v174
    %v210 = vpop.f32.mrb[0].mxu0
    %v211 = vadd.f32 %v158, %v210
    %v212 = vpop.f32.mrb[0].mxu0
    %v213 = vpop.f32.mrb[0].mxu0
    %v214 = vpop.f32.mrb[0].mxu0
    %215 = vdwg.mxu0
    %v216 = vmax.f32 %v211, 0.0
    %v217 = vpack.c.bf16 %v216, %v216
    %v218 = vld [vmem:[%s5] sm:$0xf]
    %v219 = vld [vmem:[%s5 + $0x4] sm:$0xf]
    %v220 = vld [vmem:[%s5 + $0x8] sm:$0xf]
    %v221 = vld [vmem:[%s5 + $0xc] sm:$0xf]
    %v222 = vld [vmem:[%s6] sm:$0x1]
    %v224 = vlaneseq
    %v225 = vshrl.u32 %v224, 7
    %v226 = vsub.s32 0, %v225
    %v227 = vrot.slane %v222, %v226
    %v233 = vunpack.c.l.b16 %v218
    %v234 = vunpack.c.l.b16 %v219
    %v235 = vunpack.c.l.b16 %v220
    %v236 = vunpack.c.l.b16 %v221
    %v237 = vpack.c.b16 %v234, %v233
    %v238 = vpack.c.b16 %v236, %v235
    %v242 = vsel %vm172, %v217, 0
    %244 = vmatprep.subr.bf16.mxu0 0
    %245 = vmatpush1.bf16.msra.mxu0 %v237
    %246 = vmatprep.subr.bf16.mxu0 0
    %247 = vmatpush1.bf16.msra.mxu0 %v238
    %248 = vmatprep.subr.bf16.mxu0 0
    %249 = vmatpush1.bf16.msra.mxu0 0
    %250 = vmatprep.subr.bf16.mxu0 0
    %251 = vmatpush1.bf16.msra.mxu0 0
    %252 = vmatprep.subr.bf16.mxu0 0
    %253 = vmatpush1.bf16.msra.mxu0 0
    %254 = vmatprep.subr.bf16.mxu0 0
    %255 = vmatpush1.bf16.msra.mxu0 0
    %256 = vmatprep.subr.bf16.mxu0 0
    %257 = vmatpush1.bf16.msra.mxu0 0
    %258 = vmatprep.subr.bf16.mxu0 0
    %259 = vmatpush1.bf16.msra.mxu0 0
    %260 = vmatprep.subr.bf16.mxu0 0
    %261 = vmatpush1.bf16.msra.mxu0 0
    %262 = vmatprep.subr.bf16.mxu0 0
    %263 = vmatpush1.bf16.msra.mxu0 0
    %264 = vmatprep.subr.bf16.mxu0 0
    %265 = vmatpush1.bf16.msra.mxu0 0
    %266 = vmatprep.subr.bf16.mxu0 0
    %267 = vmatpush1.bf16.msra.mxu0 0
    %268 = vmatprep.subr.bf16.mxu0 0
    %269 = vmatpush1.bf16.msra.mxu0 0
    %270 = vmatprep.subr.bf16.mxu0 0
    %271 = vmatpush1.bf16.msra.mxu0 0
    %272 = vmatprep.subr.bf16.mxu0 0
    %273 = vmatpush1.bf16.msra.mxu0 0
    %274 = vmatprep.subr.bf16.mxu0 0
    %275 = vmatpush1.bf16.msra.mxu0 0
    %276 = vmatprep.mubr.bf16.mxu0 0
    %277 = vmatmul.mubr.bf16.gmra.mrb[0].mxu0 %v242
    %v278 = vpop.f32.mrb[0].mxu0
    %v279 = vadd.f32 %v227, %v278
    %v280 = vpop.f32.mrb[0].mxu0
    %v281 = vpop.f32.mrb[0].mxu0
    %v282 = vpop.f32.mrb[0].mxu0
    %283 = vdwg.mxu0
    %v284 = vmax.f32 %v279, 0.0
    %v285 = vpack.c.bf16 %v284, %v284
    %v286 = vld [vmem:[#allocation8] sm:$0xf]
    %v287 = vld [vmem:[#allocation8 + $0x4] sm:$0xf]
    %v288 = vld [vmem:[#allocation8 + $0x8] sm:$0xf]
    %v289 = vld [vmem:[#allocation8 + $0xc] sm:$0xf]
    %v290 = vld [vmem:[%s8] sm:$0x1]
    %v292 = vlaneseq
    %v293 = vshrl.u32 %v292, 7
    %v294 = vsub.s32 0, %v293
    %v295 = vrot.slane %v290, %v294
    %v301 = vunpack.c.l.b16 %v286
    %v302 = vunpack.c.l.b16 %v287
    %v303 = vunpack.c.l.b16 %v288
    %v304 = vunpack.c.l.b16 %v289
    %v305 = vpack.c.b16 %v302, %v301
    %v306 = vpack.c.b16 %v304, %v303
    %v310 = vsel %vm172, %v285, 0
    %312 = vmatprep.subr.bf16.mxu0 0
    %313 = vmatpush1.bf16.msra.mxu0 %v305
    %314 = vmatprep.subr.bf16.mxu0 0
    %315 = vmatpush1.bf16.msra.mxu0 %v306
    %316 = vmatprep.subr.bf16.mxu0 0
    %317 = vmatpush1.bf16.msra.mxu0 0
    %318 = vmatprep.subr.bf16.mxu0 0
    %319 = vmatpush1.bf16.msra.mxu0 0
    %320 = vmatprep.subr.bf16.mxu0 0
    %321 = vmatpush1.bf16.msra.mxu0 0
    %322 = vmatprep.subr.bf16.mxu0 0
    %323 = vmatpush1.bf16.msra.mxu0 0
    %324 = vmatprep.subr.bf16.mxu0 0
    %325 = vmatpush1.bf16.msra.mxu0 0
    %326 = vmatprep.subr.bf16.mxu0 0
    %327 = vmatpush1.bf16.msra.mxu0 0
    %328 = vmatprep.subr.bf16.mxu0 0
    %329 = vmatpush1.bf16.msra.mxu0 0
    %330 = vmatprep.subr.bf16.mxu0 0
    %331 = vmatpush1.bf16.msra.mxu0 0
    %332 = vmatprep.subr.bf16.mxu0 0
    %333 = vmatpush1.bf16.msra.mxu0 0
    %334 = vmatprep.subr.bf16.mxu0 0
    %335 = vmatpush1.bf16.msra.mxu0 0
    %336 = vmatprep.subr.bf16.mxu0 0
    %337 = vmatpush1.bf16.msra.mxu0 0
    %338 = vmatprep.subr.bf16.mxu0 0
    %339 = vmatpush1.bf16.msra.mxu0 0
    %340 = vmatprep.subr.bf16.mxu0 0
    %341 = vmatpush1.bf16.msra.mxu0 0
    %342 = vmatprep.subr.bf16.mxu0 0
    %343 = vmatpush1.bf16.msra.mxu0 0
    %344 = vmatprep.mubr.bf16.mxu0 0
    %345 = vmatmul.mubr.bf16.gmra.mrb[0].mxu0 %v310
    %v346 = vpop.f32.mrb[0].mxu0
    %v347 = vadd.f32 %v295, %v346
    %v348 = vpop.f32.mrb[0].mxu0
    %v349 = vpop.f32.mrb[0].mxu0
    %v350 = vpop.f32.mrb[0].mxu0
    %351 = vdwg.mxu0
    %352 = vst [vmem:[#allocation10] sm:$0xff] %v347
    // Predicated region
    $region54: #{tpu_custom_call.1} parent=1 // pred_check
      _
    $region55: #{tpu_custom_call.1} parent=1 // pred_check_branch
      %354 = sbr.rel (0) target = $region57
    $region56: #{tpu_custom_call.1} parent=1 // pred_region
      %s356 = ssub.s32 128, 128
      %357 = vsyncadd [#allocation4], %s356
      %s359 = sshll.u32 [#allocation10], 4
      %s360 = int_to_ptr.vmem [resolvable:$true] %s359
      %362 = dma.vmem_to_hbm [thread:$0]  %s360, 128, %s9, [#allocation4]
    $region57: #{tpu_custom_call.1} parent=1 // pred_fallthru
      _
    // Predicated region
    $region58: #{tpu_custom_call.1} parent=1 // pred_check
      _
    $region59: #{tpu_custom_call.1} parent=1 // pred_check_branch
      %364 = sbr.rel (0) target = $region61
    $region60: #{tpu_custom_call.1} parent=1 // pred_region
      %365 = dma.done [#allocation4], 128
    $region61: #{tpu_custom_call.1} parent=1 // pred_fallthru
      _
    %366 = vsyncpa [#allocation3], 1
    %367 = vsyncpa [#allocation6], 1
    %368 = vsyncpa [#allocation9], 1
    %369 = vsyncpa [#allocation4], 1

</llo_original>
